<compile_context>
chip_gen: v7x
topology: tpu7x:2x2x1
jax: 0.10.0
libtpu: 0.0.40
codegen_flags: <defaults>
</compile_context>

<pallas_src>
import functools
import math

import jax
import jax.numpy as jnp
from jax.experimental import pallas as pl
from jax.experimental.pallas import tpu as pltpu


# ----------------------------------------------------------------------------
# Helpers
# ----------------------------------------------------------------------------
def _round_up(a, b):
    return (a + b - 1) // b * b


def _vmem_cap_bytes():
    try:
        return int(pltpu.get_tpu_info().vmem_capacity_bytes)
    except Exception:
        return 64 * 1024 * 1024   # conservative fallback (v7x per-TC VMEM)


def _pick_tile_k(K, groupsize, tile_k_max):
    """Largest legal K tile: divides K, and (unless tile_k == K) is a multiple
    of lcm(8*groupsize, 128) so every BlockSpec keeps (8,128)-legal dims."""
    if K <= tile_k_max:
        return K
    step = math.lcm(8 * groupsize, 128)
    best = None
    t = step
    while t <= tile_k_max:
        if K % t == 0:
            best = t
        t += step
    return best if best is not None else K


# ----------------------------------------------------------------------------
# Pallas kernel: int4 unpack -> f32 scratch slab -> fold scale -> one K-deep dot
# ----------------------------------------------------------------------------
def _qlinear_kernel(x_ref, xs_ref, qw_ref, s_ref, sz_ref, o_ref,
                    wslab_ref, acc_ref, *, groupsize, tk8):
    # x_ref   : (TM, TK)   bf16  activation K-slice
    # xs_ref  : (TM, G)    f32   per-group row sums of bf16-rounded x (all groups)
    # qw_ref  : (TK8, TN)  i32   per-K-tile repacked int4 weights
    # s_ref   : (GK, TN)   f32   dequant scales for this K-tile's groups
    # sz_ref  : (G, TN)    f32   scale*zero for ALL groups (resident across ki)
    # o_ref   : (TM, TN)   x.dtype
    # wslab   : (TK, TN)   f32   unpacked raw-int4 slab (scratch)
    # acc     : (TM, TN)   f32   output accumulator (scratch)
    tk, tn = wslab_ref.shape
    gk = tk // groupsize
    ki = pl.program_id(2)

    @pl.when(ki == 0)
    def _():
        # Factored zero-point correction, applied once per output tile in f32:
        #   out = sum_k x_k * s_g(k) * q_k  -  sum_g xsum_g * (s_g * z_g)
        acc_ref[...] = -jnp.dot(xs_ref[...], sz_ref[...],
                                preferred_element_type=jnp.float32)

    # Unpack the 8 int4 nibble planes of this K-tile straight into the f32
    # scratch slab in original row order (offline repack puts plane j at local
    # rows [j*TK8, (j+1)*TK8)).  Ops per weight: shift, and, int->f32 cast.
    qw = qw_ref[...]
    for j in range(8):
        wslab_ref[j * tk8:(j + 1) * tk8, :] = (
            (qw >> (4 * j)) & 15).astype(jnp.float32)
    # TODO(synk): bitcast to uint32 for logical shifts so the top nibble can
    # drop its `& 15` (saves ~3% of the unpack VPU work).

    # Fold the per-group scale into the weights in f32 (single bf16 rounding of
    # the product) and issue ONE K-deep MXU dot.
    ws = (wslab_ref[...].reshape(gk, groupsize, tn)
          * s_ref[...].reshape(gk, 1, tn)).astype(jnp.bfloat16).reshape(tk, tn)
    acc_ref[...] += jnp.dot(x_ref[...], ws, preferred_element_type=jnp.float32)

    @pl.when(ki == pl.num_programs(2) - 1)
    def _():
        o_ref[...] = acc_ref[...].astype(o_ref.dtype)


# ----------------------------------------------------------------------------
# One-time (weight-load-time) parameter preparation
# ----------------------------------------------------------------------------
def prepare_quant_linear_params(params, *, in_features, out_features,
                                groupsize, bits=4, tile_k_max=8192):
    assert bits == 4, "kernel implements the bits=4 asym path"
    K, N = in_features, out_features
    groupsize = groupsize if groupsize != -1 else K
    assert K % 8 == 0 and groupsize % 8 == 0 and K % groupsize == 0
    G = K // groupsize
    maxq = (1 << bits) - 1
    wf = jnp.arange(0, 32, bits, dtype=jnp.int32)

    qweight = params["qweight"].astype(jnp.int32)        # (K//8, N)
    qzeros = params["qzeros"].astype(jnp.int32)          # (G, N//8)
    qscales = params["qscales"]                          # (G, N, 1) uint8 (v1)
    qscales_zeros = params["qscales_zeros"]              # (1, N, 1) f16
    qscales_scales = params["qscales_scales"]            # (1, N, 1) f16
    g_idx = params["g_idx"]

    # Kernel assumes the canonical contiguous group mapping (no act-order).
    expected = (jnp.arange(K, dtype=jnp.int32) // groupsize).astype(jnp.int32)
    assert bool(jnp.all(g_idx == expected)), \
        "permuted g_idx (GPTQ desc_act) is not supported by this kernel"
    # TODO(synk): support permuted g_idx by permuting the K axis offline.

    tile_k = _pick_tile_k(K, groupsize, tile_k_max)
    assert K % tile_k == 0 and tile_k % groupsize == 0 and tile_k % 8 == 0
    k_tiles = K // tile_k
    tk8 = tile_k // 8

    # Unpack to original row order (row r = 8*w + nibble j, as in the module),
    # then repack PER K-TILE so that within tile t, nibble j of packed word w
    # holds original row t*tile_k + j*tk8 + w.  In-kernel plane unpack then
    # rebuilds each tile's rows contiguously with no per-call regroup.
    w_u = ((qweight[:, None, :] >> wf[None, :, None]) & maxq).reshape(K, N)
    planes = w_u.reshape(k_tiles, 8, tk8, N)
    qw_r = planes[:, 0]
    for j in range(1, 8):
        qw_r = qw_r | (planes[:, j] << (4 * j))
    qw_r = qw_r.reshape(K // 8, N).astype(jnp.int32)

    # Compact (G, N) zeros (+1, GPTQ convention) and double-dequant scales.
    z_nib = (qzeros[:, :, None] >> wf[None, None, :]) & maxq          # (G, N//8, 8)
    zeros_g = (z_nib + 1).reshape(G, N).astype(jnp.float32)           # (G, N)
    scales_g = ((qscales.astype(jnp.float32).reshape(G, N)
                 - qscales_zeros.astype(jnp.float32).reshape(1, N))
                * qscales_scales.astype(jnp.float32).reshape(1, N))   # (G, N)

    return {
        "qweight_repacked": qw_r,                # (K//8, N) int32 (per-tile planes)
        "scales_g": scales_g,                    # (G, N) f32
        "scale_zeros_g": scales_g * zeros_g,     # (G, N) f32
        "tile_k": int(tile_k),
        "groupsize": int(groupsize),
    }


# ----------------------------------------------------------------------------
# Forward wrapper
# ----------------------------------------------------------------------------
def quant_linear_forward(x, prepared, *, in_features, out_features, groupsize,
                         tile_m=512, tile_n=256):
    K, N = in_features, out_features
    groupsize = groupsize if groupsize != -1 else K
    assert K % 128 == 0, "in_features must be a multiple of 128"
    assert N % 128 == 0, "out_features must be a multiple of 128"
    assert K % groupsize == 0
    assert prepared["groupsize"] == groupsize
    G = K // groupsize

    tk = int(prepared["tile_k"])
    assert K % tk == 0 and tk % groupsize == 0
    assert tk == K or (tk % 128 == 0 and (tk // groupsize) % 8 == 0)
    tk8 = tk // 8
    gk = tk // groupsize
    k_tiles = K // tk

    qw_r = prepared["qweight_repacked"]
    scales_g = prepared["scales_g"]
    sz_g = prepared["scale_zeros_g"]

    lead = x.shape[:-1]
    M = 1
    for d in lead:
        M *= int(d)

    out_dtype = x.dtype
    out_itemsize = jnp.dtype(out_dtype).itemsize

    tn = tile_n if N % tile_n == 0 else 128
    tm = min(tile_m, _round_up(M, 8))

    # Generation-aware VMEM budget: never request more than ~85% of physical
    # VMEM; shrink tile_m (never the lane-dense N tile) if the estimate busts it.
    cap = int(0.85 * _vmem_cap_bytes())

    def _est(tm_):
        return (2 * tm_ * tk * 2          # x (double-buffered, bf16)
                + 2 * tm_ * G * 4         # xsum
                + 2 * tk8 * tn * 4        # packed int4 weights
                + 2 * gk * tn * 4         # scales
                + 2 * G * tn * 4          # scale*zero
                + 2 * tm_ * tn * out_itemsize   # out
                + tk * tn * 4             # f32 unpack slab scratch
                + tk * tn * 2             # materialized bf16 dot operand
                + tm_ * tn * 4)           # f32 accumulator

    while _est(tm) > cap and tm > 8:
        tm = max(8, tm // 2)
    m_pad = _round_up(M, tm)

    xb = x.reshape(M, K).astype(jnp.bfloat16)            # bf16 MXU operand
    if m_pad != M:
        xb = jnp.pad(xb, ((0, m_pad - M), (0, 0)))
    # Per-group row sums of the *bf16-rounded* x (consistent with the MXU dot).
    # TODO(synk): fuse this reduction into the kernel (XLU slot has slack) to
    # drop the extra HBM pass over x for long prefill.
    xsum = xb.astype(jnp.float32).reshape(m_pad, G, groupsize).sum(axis=-1)

    grid = (m_pad // tm, N // tn, k_tiles)
    m_tiles, n_tiles = grid[0], grid[1]
    kernel = functools.partial(_qlinear_kernel, groupsize=groupsize, tk8=tk8)

    est = _est(tm)
    vmem_limit = (None if est <= 24 * 1024 * 1024
                  else int(min(cap, max(int(1.5 * est), 32 * 1024 * 1024))))

    # Weights (and the small per-group tables) are re-streamed once per M tile;
    # x is re-streamed per N tile only when K itself is tiled.
    x_passes = 1 if k_tiles == 1 else n_tiles
    cost = pl.CostEstimate(
        flops=2 * m_pad * K * N,
        transcendentals=0,
        bytes_accessed=int(xb.size * 2 * x_passes + xsum.size * 4
                           + (qw_r.size * 4
                              + (scales_g.size + sz_g.size) * 4) * m_tiles
                           + m_pad * N * out_itemsize))

    out = pl.pallas_call(
        kernel,
        out_shape=jax.ShapeDtypeStruct((m_pad, N), out_dtype),
        grid_spec=pltpu.PrefetchScalarGridSpec(
            num_scalar_prefetch=0,
            grid=grid,
            in_specs=[
                pl.BlockSpec((tm, tk), lambda mi, ni, ki: (mi, ki)),   # x slice
                pl.BlockSpec((tm, G), lambda mi, ni, ki: (mi, 0)),     # xsum (all groups)
                pl.BlockSpec((tk8, tn), lambda mi, ni, ki: (ki, ni)),  # packed int4
                pl.BlockSpec((gk, tn), lambda mi, ni, ki: (ki, ni)),   # scales (tile groups)
                pl.BlockSpec((G, tn), lambda mi, ni, ki: (0, ni)),     # scale*zero (all groups)
            ],
            out_specs=pl.BlockSpec((tm, tn), lambda mi, ni, ki: (mi, ni)),
            scratch_shapes=[pltpu.VMEM((tk, tn), jnp.float32),         # unpack slab
                            pltpu.VMEM((tm, tn), jnp.float32)],        # accumulator
        ),
        compiler_params=pltpu.CompilerParams(
            dimension_semantics=("parallel", "parallel", "arbitrary"),
            vmem_limit_bytes=vmem_limit),
        cost_estimate=cost,
    )(xb, xsum, qw_r, scales_g, sz_g)

    if m_pad != M:
        out = out[:M]
    return out.reshape(*lead, N)


# ----------------------------------------------------------------------------
# Pure-JAX references
# ----------------------------------------------------------------------------
def ref_quant_linear(x, params, *, in_features, out_features, groupsize, bits=4):
    """Faithful f32 mirror of the PyTorch forward (asym=True, v1=True, bits=4)."""
    K, N = in_features, out_features
    G = math.ceil(K / groupsize)
    wf = jnp.arange(0, 32, bits, dtype=jnp.int32)
    maxq = 2 ** bits - 1
    qweight, qzeros, qscales = params["qweight"], params["qzeros"], params["qscales"]
    qscales_zeros, qscales_scales = params["qscales_zeros"], params["qscales_scales"]
    g_idx = params["g_idx"]

    w_u = ((qweight.astype(jnp.int32)[:, None, :] >> wf[None, :, None]) & maxq).reshape(K, N)
    z_u = (((qzeros.astype(jnp.int32)[:, :, None] >> wf[None, None, :]) & maxq) + 1).reshape(G, N)
    z_k = z_u[g_idx]
    scales = ((qscales.astype(jnp.float32).reshape(G, N)
               - qscales_zeros.astype(jnp.float32).reshape(1, N))
              * qscales_scales.astype(jnp.float32).reshape(1, N))
    s_k = scales[g_idx]
    w = (w_u - z_k).astype(jnp.float32) * s_k
    x2 = x.reshape(-1, K).astype(jnp.float32)
    out = jnp.dot(x2, w, precision=jax.lax.Precision.HIGHEST)
    return out.reshape(*x.shape[:-1], N)


def ref_kernel_numerics(x, params, *, in_features, out_features, groupsize, bits=4):
    """Mirrors the kernel's exact factoring/rounding: bf16 x, bf16(s*q) weights,
    f32 zero-point correction via per-group x sums."""
    K, N = in_features, out_features
    G = K // groupsize
    wf = jnp.arange(0, 32, bits, dtype=jnp.int32)
    maxq = 2 ** bits - 1
    w_u = (((params["qweight"].astype(jnp.int32)[:, None, :] >> wf[None, :, None]) & maxq)
           .reshape(K, N).astype(jnp.float32))
    z_u = ((((params["qzeros"].astype(jnp.int32)[:, :, None] >> wf[None, None, :]) & maxq) + 1)
           .reshape(G, N).astype(jnp.float32))
    scales = ((params["qscales"].astype(jnp.float32).reshape(G, N)
               - params["qscales_zeros"].astype(jnp.float32).reshape(1, N))
              * params["qscales_scales"].astype(jnp.float32).reshape(1, N))
    s_rows = jnp.repeat(scales, groupsize, axis=0)                     # (K, N)
    w_fold = (w_u * s_rows).astype(jnp.bfloat16).astype(jnp.float32)   # bf16(s*q)
    xb = x.reshape(-1, K).astype(jnp.bfloat16).astype(jnp.float32)
    xsum = xb.reshape(-1, G, groupsize).sum(axis=-1)
    out = (jnp.dot(xb, w_fold, precision=jax.lax.Precision.HIGHEST)
           - jnp.dot(xsum, scales * z_u, precision=jax.lax.Precision.HIGHEST))
    return out.reshape(*x.shape[:-1], N)


# ----------------------------------------------------------------------------
if __name__ == "__main__":
    # Module config: asym=True, v1=True, bits=4, groupsize=64, double_groupsize=1
    in_features, out_features = 256, 256
    groupsize = 64
    bits = 4
    B, S = 2, 8
    G = math.ceil(in_features / groupsize)

    key = jax.random.PRNGKey(0)
    k1, k2, k3, k4, k5, k6 = jax.random.split(key, 6)

    x = jax.random.normal(k1, (B, S, in_features), dtype=jnp.float32)
    qweight = jax.random.randint(
        k2, (math.ceil(in_features / 256 * (bits * 8)), out_features),
        0, 2 ** 31 - 1, dtype=jnp.int32)
    qzeros = jax.random.randint(
        k3, (G, math.ceil(out_features / 256 * (bits * 8))),
        0, 2 ** 31 - 1, dtype=jnp.int32)
    qscales = jax.random.randint(
        k4, (G, out_features, 1), 0, 256, dtype=jnp.int32).astype(jnp.uint8)
    qscales_zeros = jax.random.uniform(
        k5, (1, out_features, 1), minval=0.0, maxval=16.0).astype(jnp.float16)
    qscales_scales = jax.random.uniform(
        k6, (1, out_features, 1), minval=1e-3, maxval=1e-2).astype(jnp.float16)
    g_idx = (jnp.arange(in_features, dtype=jnp.int32) // groupsize).astype(jnp.int32)
    # `bias` buffer exists in the module but disable_bias=True -> unused in forward.

    params = dict(qweight=qweight, qzeros=qzeros, qscales=qscales,
                  qscales_zeros=qscales_zeros, qscales_scales=qscales_scales,
                  g_idx=g_idx)

    # One-time (weight-load-time) prep, then the fused forward.
    prepared = prepare_quant_linear_params(
        params, in_features=in_features, out_features=out_features,
        groupsize=groupsize, bits=bits)

    out = quant_linear_forward(x, prepared, in_features=in_features,
                               out_features=out_features, groupsize=groupsize)
    out = jax.block_until_ready(out)

    # References:
    #  1) kernel-numerics ref (same factoring & bf16 rounding as the kernel)
    #  2) bf16-x / f32-weight ref (only extra error is the bf16(s*q) fold)
    #  3) full-f32 PyTorch-faithful ref
    ref_kern = ref_kernel_numerics(x, params, in_features=in_features,
                                   out_features=out_features,
                                   groupsize=groupsize, bits=bits)
    x_b16 = x.astype(jnp.bfloat16).astype(jnp.float32)
    ref_b16 = ref_quant_linear(x_b16, params, in_features=in_features,
                               out_features=out_features, groupsize=groupsize,
                               bits=bits)
    ref_f32 = ref_quant_linear(x, params, in_features=in_features,
                               out_features=out_features, groupsize=groupsize,
                               bits=bits)

    def rel_err(a, b):
        return float(jnp.max(jnp.abs(a - b)) /
                     jnp.maximum(1.0, jnp.max(jnp.abs(b))))

    err_exact = rel_err(out, ref_kern)   # same numerics as the kernel
    err_b16 = rel_err(out, ref_b16)      # + bf16 rounding of the folded scale
    err_f32 = rel_err(out, ref_f32)      # f32 PyTorch-faithful
    assert out.shape == (B, S, out_features), out.shape
    assert err_exact < 2e-3, f"mismatch vs kernel-numerics reference: {err_exact}"
    assert err_b16 < 1e-2, f"mismatch vs bf16-x reference: {err_b16}"
    assert err_f32 < 2e-2, f"mismatch vs f32 reference: {err_f32}"
    print("KERNEL_OK")
</pallas_src>

<mosaic_0001>
module attributes {stable_mosaic.version = 11 : i64} {
  func.func @_qlinear_kernel(%arg0: i32, %arg1: i32, %arg2: i32, %arg3: memref<16x256xbf16, #tpu.memory_space<vmem>>, %arg4: memref<16x4xf32, #tpu.memory_space<vmem>>, %arg5: memref<32x256xi32, #tpu.memory_space<vmem>>, %arg6: memref<4x256xf32, #tpu.memory_space<vmem>>, %arg7: memref<4x256xf32, #tpu.memory_space<vmem>>, %arg8: memref<16x256xf32, #tpu.memory_space<vmem>>, %arg9: memref<256x256xf32, #tpu.memory_space<vmem>>, %arg10: memref<16x256xf32, #tpu.memory_space<vmem>>) attributes {dimension_semantics = [#tpu.dimension_semantics<parallel>, #tpu.dimension_semantics<parallel>, #tpu.dimension_semantics<arbitrary>], iteration_bounds = array<i64: 1, 1, 1>, scalar_prefetch = 0 : i64, scratch_operands = 2 : i64, tpu.core_type = #tpu.core_type<tc>, window_params = [{transform_indices = @transform_0, window_bounds = array<i64: 16, 256>}, {transform_indices = @transform_1, window_bounds = array<i64: 16, 4>}, {transform_indices = @transform_2, window_bounds = array<i64: 32, 256>}, {transform_indices = @transform_3, window_bounds = array<i64: 4, 256>}, {transform_indices = @transform_4, window_bounds = array<i64: 4, 256>}, {transform_indices = @transform_5, window_bounds = array<i64: 16, 256>}]} {
    %c0_i32 = arith.constant 0 : i32
    %0 = arith.cmpi eq, %arg2, %c0_i32 : i32
    %1 = arith.extui %0 : i1 to i32
    %c0_i32_0 = arith.constant 0 : i32
    %2 = arith.cmpi ne, %1, %c0_i32_0 : i32
    scf.if %2 {
      %c0_31 = arith.constant 0 : index
      %c0_32 = arith.constant 0 : index
      %68 = vector.load %arg4[%c0_31, %c0_32] : memref<16x4xf32, #tpu.memory_space<vmem>>, vector<16x4xf32>
      %c0_33 = arith.constant 0 : index
      %c0_34 = arith.constant 0 : index
      %69 = vector.load %arg7[%c0_33, %c0_34] : memref<4x256xf32, #tpu.memory_space<vmem>>, vector<4x256xf32>
      %cst_35 = arith.constant dense<0.000000e+00> : vector<16x256xf32>
      %70 = tpu.matmul %68, %69, %cst_35 {dimension_numbers = #tpu.dot_dimension_numbers<[1], [0], [0], [1], [0, 0, 1, 1], [], []>} : vector<16x4xf32>, vector<4x256xf32>, vector<16x256xf32> -> vector<16x256xf32>
      %cst_36 = arith.constant 0.000000e+00 : f32
      %71 = vector.broadcast %cst_36 : f32 to vector<16x256xf32>
      %72 = arith.subf %71, %70 : vector<16x256xf32>
      %c0_37 = arith.constant 0 : index
      %c0_38 = arith.constant 0 : index
      %73 = vector.load %arg10[%c0_37, %c0_38] : memref<16x256xf32, #tpu.memory_space<vmem>>, vector<16x256xf32>
      tpu.vector_store %arg10[%c0_37, %c0_38], %72 {strides = array<i32>} : memref<16x256xf32, #tpu.memory_space<vmem>>, vector<16x256xf32>,
    } else {
    }
    %c0 = arith.constant 0 : index
    %c0_1 = arith.constant 0 : index
    %3 = vector.load %arg5[%c0, %c0_1] : memref<32x256xi32, #tpu.memory_space<vmem>>, vector<32x256xi32>
    %c0_i32_2 = arith.constant 0 : i32
    %4 = vector.broadcast %c0_i32_2 : i32 to vector<32x256xi32>
    %5 = arith.shrsi %3, %4 : vector<32x256xi32>
    %c15_i32 = arith.constant 15 : i32
    %6 = vector.broadcast %c15_i32 : i32 to vector<32x256xi32>
    %7 = arith.andi %5, %6 : vector<32x256xi32>
    %8 = arith.sitofp %7 : vector<32x256xi32> to vector<32x256xf32>
    %c0_3 = arith.constant 0 : index
    %c0_4 = arith.constant 0 : index
    %9 = vector.load %arg9[%c0_3, %c0_4] : memref<256x256xf32, #tpu.memory_space<vmem>>, vector<32x256xf32>
    tpu.vector_store %arg9[%c0_3, %c0_4], %8 {strides = array<i32>} : memref<256x256xf32, #tpu.memory_space<vmem>>, vector<32x256xf32>,
    %c4_i32 = arith.constant 4 : i32
    %10 = vector.broadcast %c4_i32 : i32 to vector<32x256xi32>
    %11 = arith.shrsi %3, %10 : vector<32x256xi32>
    %c15_i32_5 = arith.constant 15 : i32
    %12 = vector.broadcast %c15_i32_5 : i32 to vector<32x256xi32>
    %13 = arith.andi %11, %12 : vector<32x256xi32>
    %14 = arith.sitofp %13 : vector<32x256xi32> to vector<32x256xf32>
    %c32 = arith.constant 32 : index
    %c0_6 = arith.constant 0 : index
    %15 = vector.load %arg9[%c32, %c0_6] : memref<256x256xf32, #tpu.memory_space<vmem>>, vector<32x256xf32>
    tpu.vector_store %arg9[%c32, %c0_6], %14 {strides = array<i32>} : memref<256x256xf32, #tpu.memory_space<vmem>>, vector<32x256xf32>,
    %c8_i32 = arith.constant 8 : i32
    %16 = vector.broadcast %c8_i32 : i32 to vector<32x256xi32>
    %17 = arith.shrsi %3, %16 : vector<32x256xi32>
    %c15_i32_7 = arith.constant 15 : i32
    %18 = vector.broadcast %c15_i32_7 : i32 to vector<32x256xi32>
    %19 = arith.andi %17, %18 : vector<32x256xi32>
    %20 = arith.sitofp %19 : vector<32x256xi32> to vector<32x256xf32>
    %c64 = arith.constant 64 : index
    %c0_8 = arith.constant 0 : index
    %21 = vector.load %arg9[%c64, %c0_8] : memref<256x256xf32, #tpu.memory_space<vmem>>, vector<32x256xf32>
    tpu.vector_store %arg9[%c64, %c0_8], %20 {strides = array<i32>} : memref<256x256xf32, #tpu.memory_space<vmem>>, vector<32x256xf32>,
    %c12_i32 = arith.constant 12 : i32
    %22 = vector.broadcast %c12_i32 : i32 to vector<32x256xi32>
    %23 = arith.shrsi %3, %22 : vector<32x256xi32>
    %c15_i32_9 = arith.constant 15 : i32
    %24 = vector.broadcast %c15_i32_9 : i32 to vector<32x256xi32>
    %25 = arith.andi %23, %24 : vector<32x256xi32>
    %26 = arith.sitofp %25 : vector<32x256xi32> to vector<32x256xf32>
    %c96 = arith.constant 96 : index
    %c0_10 = arith.constant 0 : index
    %27 = vector.load %arg9[%c96, %c0_10] : memref<256x256xf32, #tpu.memory_space<vmem>>, vector<32x256xf32>
    tpu.vector_store %arg9[%c96, %c0_10], %26 {strides = array<i32>} : memref<256x256xf32, #tpu.memory_space<vmem>>, vector<32x256xf32>,
    %c16_i32 = arith.constant 16 : i32
    %28 = vector.broadcast %c16_i32 : i32 to vector<32x256xi32>
    %29 = arith.shrsi %3, %28 : vector<32x256xi32>
    %c15_i32_11 = arith.constant 15 : i32
    %30 = vector.broadcast %c15_i32_11 : i32 to vector<32x256xi32>
    %31 = arith.andi %29, %30 : vector<32x256xi32>
    %32 = arith.sitofp %31 : vector<32x256xi32> to vector<32x256xf32>
    %c128 = arith.constant 128 : index
    %c0_12 = arith.constant 0 : index
    %33 = vector.load %arg9[%c128, %c0_12] : memref<256x256xf32, #tpu.memory_space<vmem>>, vector<32x256xf32>
    tpu.vector_store %arg9[%c128, %c0_12], %32 {strides = array<i32>} : memref<256x256xf32, #tpu.memory_space<vmem>>, vector<32x256xf32>,
    %c20_i32 = arith.constant 20 : i32
    %34 = vector.broadcast %c20_i32 : i32 to vector<32x256xi32>
    %35 = arith.shrsi %3, %34 : vector<32x256xi32>
    %c15_i32_13 = arith.constant 15 : i32
    %36 = vector.broadcast %c15_i32_13 : i32 to vector<32x256xi32>
    %37 = arith.andi %35, %36 : vector<32x256xi32>
    %38 = arith.sitofp %37 : vector<32x256xi32> to vector<32x256xf32>
    %c160 = arith.constant 160 : index
    %c0_14 = arith.constant 0 : index
    %39 = vector.load %arg9[%c160, %c0_14] : memref<256x256xf32, #tpu.memory_space<vmem>>, vector<32x256xf32>
    tpu.vector_store %arg9[%c160, %c0_14], %38 {strides = array<i32>} : memref<256x256xf32, #tpu.memory_space<vmem>>, vector<32x256xf32>,
    %c24_i32 = arith.constant 24 : i32
    %40 = vector.broadcast %c24_i32 : i32 to vector<32x256xi32>
    %41 = arith.shrsi %3, %40 : vector<32x256xi32>
    %c15_i32_15 = arith.constant 15 : i32
    %42 = vector.broadcast %c15_i32_15 : i32 to vector<32x256xi32>
    %43 = arith.andi %41, %42 : vector<32x256xi32>
    %44 = arith.sitofp %43 : vector<32x256xi32> to vector<32x256xf32>
    %c192 = arith.constant 192 : index
    %c0_16 = arith.constant 0 : index
    %45 = vector.load %arg9[%c192, %c0_16] : memref<256x256xf32, #tpu.memory_space<vmem>>, vector<32x256xf32>
    tpu.vector_store %arg9[%c192, %c0_16], %44 {strides = array<i32>} : memref<256x256xf32, #tpu.memory_space<vmem>>, vector<32x256xf32>,
    %c28_i32 = arith.constant 28 : i32
    %46 = vector.broadcast %c28_i32 : i32 to vector<32x256xi32>
    %47 = arith.shrsi %3, %46 : vector<32x256xi32>
    %c15_i32_17 = arith.constant 15 : i32
    %48 = vector.broadcast %c15_i32_17 : i32 to vector<32x256xi32>
    %49 = arith.andi %47, %48 : vector<32x256xi32>
    %50 = arith.sitofp %49 : vector<32x256xi32> to vector<32x256xf32>
    %c224 = arith.constant 224 : index
    %c0_18 = arith.constant 0 : index
    %51 = vector.load %arg9[%c224, %c0_18] : memref<256x256xf32, #tpu.memory_space<vmem>>, vector<32x256xf32>
    tpu.vector_store %arg9[%c224, %c0_18], %50 {strides = array<i32>} : memref<256x256xf32, #tpu.memory_space<vmem>>, vector<32x256xf32>,
    %c0_19 = arith.constant 0 : index
    %c0_20 = arith.constant 0 : index
    %52 = vector.load %arg9[%c0_19, %c0_20] : memref<256x256xf32, #tpu.memory_space<vmem>>, vector<256x256xf32>
    %53 = vector.shape_cast %52 : vector<256x256xf32> to vector<4x64x256xf32>
    %c0_21 = arith.constant 0 : index
    %c0_22 = arith.constant 0 : index
    %54 = vector.load %arg6[%c0_21, %c0_22] : memref<4x256xf32, #tpu.memory_space<vmem>>, vector<4x256xf32>
    %55 = vector.shape_cast %54 : vector<4x256xf32> to vector<4x1x256xf32>
    %56 = vector.broadcast %55 : vector<4x1x256xf32> to vector<4x64x256xf32>
    %57 = arith.mulf %53, %56 : vector<4x64x256xf32>
    %58 = arith.truncf %57 : vector<4x64x256xf32> to vector<4x64x256xbf16>
    %59 = vector.shape_cast %58 : vector<4x64x256xbf16> to vector<256x256xbf16>
    %c0_23 = arith.constant 0 : index
    %c0_24 = arith.constant 0 : index
    %60 = vector.load %arg10[%c0_23, %c0_24] : memref<16x256xf32, #tpu.memory_space<vmem>>, vector<16x256xf32>
    %c0_25 = arith.constant 0 : index
    %c0_26 = arith.constant 0 : index
    %61 = vector.load %arg3[%c0_25, %c0_26] : memref<16x256xbf16, #tpu.memory_space<vmem>>, vector<16x256xbf16>
    %cst = arith.constant dense<0.000000e+00> : vector<16x256xf32>
    %62 = tpu.matmul %61, %59, %cst {dimension_numbers = #tpu.dot_dimension_numbers<[1], [0], [0], [1], [0, 0, 1, 1], [], []>} : vector<16x256xbf16>, vector<256x256xbf16>, vector<16x256xf32> -> vector<16x256xf32>
    %63 = arith.addf %60, %62 : vector<16x256xf32>
    %c0_27 = arith.constant 0 : index
    %c0_28 = arith.constant 0 : index
    %64 = vector.load %arg10[%c0_27, %c0_28] : memref<16x256xf32, #tpu.memory_space<vmem>>, vector<16x256xf32>
    tpu.vector_store %arg10[%c0_27, %c0_28], %63 {strides = array<i32>} : memref<16x256xf32, #tpu.memory_space<vmem>>, vector<16x256xf32>,
    %c0_i32_29 = arith.constant 0 : i32
    %65 = arith.cmpi eq, %arg2, %c0_i32_29 : i32
    %66 = arith.extui %65 : i1 to i32
    %c0_i32_30 = arith.constant 0 : i32
    %67 = arith.cmpi ne, %66, %c0_i32_30 : i32
    scf.if %67 {
      %c0_31 = arith.constant 0 : index
      %c0_32 = arith.constant 0 : index
      %68 = vector.load %arg10[%c0_31, %c0_32] : memref<16x256xf32, #tpu.memory_space<vmem>>, vector<16x256xf32>
      %c0_33 = arith.constant 0 : index
      %c0_34 = arith.constant 0 : index
      %69 = vector.load %arg8[%c0_33, %c0_34] : memref<16x256xf32, #tpu.memory_space<vmem>>, vector<16x256xf32>
      tpu.vector_store %arg8[%c0_33, %c0_34], %68 {strides = array<i32>} : memref<16x256xf32, #tpu.memory_space<vmem>>, vector<16x256xf32>,
    } else {
    }
    return
  }
  func.func @transform_0(%arg0: i32, %arg1: i32, %arg2: i32) -> (i32, i32) {
    %c0_i32 = arith.constant 0 : i32
    return %arg0, %arg2 : i32, i32
  }
  func.func @transform_1(%arg0: i32, %arg1: i32, %arg2: i32) -> (i32, i32) {
    %c0_i32 = arith.constant 0 : i32
    %c0_i32_0 = arith.constant 0 : i32
    return %arg0, %c0_i32 : i32, i32
  }
  func.func @transform_2(%arg0: i32, %arg1: i32, %arg2: i32) -> (i32, i32) {
    %c0_i32 = arith.constant 0 : i32
    return %arg2, %arg1 : i32, i32
  }
  func.func @transform_3(%arg0: i32, %arg1: i32, %arg2: i32) -> (i32, i32) {
    %c0_i32 = arith.constant 0 : i32
    return %arg2, %arg1 : i32, i32
  }
  func.func @transform_4(%arg0: i32, %arg1: i32, %arg2: i32) -> (i32, i32) {
    %c0_i32 = arith.constant 0 : i32
    %c0_i32_0 = arith.constant 0 : i32
    return %c0_i32, %arg1 : i32, i32
  }
  func.func @transform_5(%arg0: i32, %arg1: i32, %arg2: i32) -> (i32, i32) {
    %c0_i32 = arith.constant 0 : i32
    return %arg0, %arg1 : i32, i32
  }
}

</mosaic_0001>

<llo_original>
// kernel: tpu_custom_call.1
$region0: #{tpu_custom_call.1}
  #allocation0 [shape = 'u32[]', space=smem, size = 0x4, offset = 0x4, fixed_abs, tag = 'smem constant byte address 0x4 - core index']
  #allocation1 [shape = 'u32[144,128]{1,0:T(1,128)}', space=vmem, size = 0x12000, scoped, tag = 'internal scratch']
  #allocation2 [shape = 'f32[256,256]{1,0:T(8,128)}', space=vmem, size = 0x40000, scoped, tag = 'scratch operand']
  #allocation3 [shape = 'f32[16,256]{1,0:T(8,128)}', space=vmem, size = 0x4000, scoped, tag = 'scratch operand']
  %s0 = inlined_call_operand.vmem [shape: bf16[16,256], index: 0, kind: input, shape index: {}]
  %s1 = inlined_call_operand.vmem [shape: f32[16,4], index: 1, kind: input, shape index: {}]
  %s2 = inlined_call_operand.hbm [shape: s32[32,256], index: 2, kind: input, shape index: {}]
  %s3 = inlined_call_operand.vmem [shape: f32[4,256], index: 3, kind: input, shape index: {}]
  %s4 = inlined_call_operand.vmem [shape: f32[4,256], index: 4, kind: input, shape index: {}]
  %s5 = inlined_call_operand.hbm [shape: f32[16,256], index: 5, kind: output, shape index: {}]
  %s6 = sld [smem:[#allocation0]]
  $region42: #{tpu_custom_call.1} parent=0
    _
  %s8 = ssub.s32 1, %s6
  %s9 = scalar_select 0, %s8, %s6
  $region1: #{tpu_custom_call.1} parent=0
    #allocation4 [shape = 'u8[32768]{0}', space=vmem, size = 0x8000, scoped, tag = 'input window, operand 2, single buffered']
    #allocation5 [shape = 's32[1]{0}', space=sflag, size = 0x4, scoped, tag = 'scoped memory for tpu_custom_call.1']
    #allocation6 [shape = 's32[1]{0}', space=sflag, size = 0x4, scoped, tag = 'scoped memory for tpu_custom_call.1']
    #allocation7 [shape = 'u8[16384]{0}', space=vmem, size = 0x4000, scoped, tag = 'output window, operand 0, single buffered']
    %10 = vsyncpa [#allocation5], 0
    %11 = vsyncpa [#allocation6], 0
    // Predicated region
    $region2: #{tpu_custom_call.1} parent=1 // pred_check
      _
    $region3: #{tpu_custom_call.1} parent=1 // pred_check_branch
      %13 = sbr.rel (0) target = $region5
    $region4: #{tpu_custom_call.1} parent=1 // pred_region
      _
    $region5: #{tpu_custom_call.1} parent=1 // pred_fallthru
      _
    // Predicated region
    $region6: #{tpu_custom_call.1} parent=1 // pred_check
      _
    $region7: #{tpu_custom_call.1} parent=1 // pred_check_branch
      %15 = sbr.rel (0) target = $region9
    $region8: #{tpu_custom_call.1} parent=1 // pred_region
      _
    $region9: #{tpu_custom_call.1} parent=1 // pred_fallthru
      _
    // Predicated region
    $region10: #{tpu_custom_call.1} parent=1 // pred_check
      _
    $region11: #{tpu_custom_call.1} parent=1 // pred_check_branch
      %17 = sbr.rel (0) target = $region13
    $region12: #{tpu_custom_call.1} parent=1 // pred_region
      %s19 = ssub.s32 1024, 1024
      %20 = vsyncadd [#allocation5], %s19
      %s21 = sshll.u32 [#allocation4], 4
      %s22 = int_to_ptr.vmem [resolvable:$true] %s21
      %27 = dma.hbm_to_vmem [thread:$0]  %s2, 1024, %s22, [#allocation5], 256, 256, 16
    $region13: #{tpu_custom_call.1} parent=1 // pred_fallthru
      _
    // Predicated region
    $region14: #{tpu_custom_call.1} parent=1 // pred_check
      _
    $region15: #{tpu_custom_call.1} parent=1 // pred_check_branch
      %29 = sbr.rel (0) target = $region17
    $region16: #{tpu_custom_call.1} parent=1 // pred_region
      _
    $region17: #{tpu_custom_call.1} parent=1 // pred_fallthru
      _
    // Predicated region
    $region18: #{tpu_custom_call.1} parent=1 // pred_check
      _
    $region19: #{tpu_custom_call.1} parent=1 // pred_check_branch
      %31 = sbr.rel (0) target = $region21
    $region20: #{tpu_custom_call.1} parent=1 // pred_region
      _
    $region21: #{tpu_custom_call.1} parent=1 // pred_fallthru
      _
    // Predicated region
    $region22: #{tpu_custom_call.1} parent=1 // pred_check
      _
    $region23: #{tpu_custom_call.1} parent=1 // pred_check_branch
      %33 = sbr.rel (0) target = $region25
    $region24: #{tpu_custom_call.1} parent=1 // pred_region
      %34 = dma.done [#allocation5], 1024
    $region25: #{tpu_custom_call.1} parent=1 // pred_fallthru
      _
    %p35 = scmp.eq.s32.totalorder 0, 0
    // Predicated region
    $region26: #{tpu_custom_call.1} parent=1 // pred_check
      %p36 = pneg %p35
    $region27: #{tpu_custom_call.1} parent=1 // pred_check_branch
      %38 = sbr.rel (%p36) target = $region29
    $region28: #{tpu_custom_call.1} parent=1 // pred_region
      %v39 = vld [vmem:[%s1] sm:$0xff]
      %v40 = vld [vmem:[%s1 + $0x8] sm:$0xff]
      %v41 = vld [vmem:[%s4] sm:$0xff]
      %v43 = vcombine.high %v41, %v41
      %vm44 = vcmask 31744
      %v46 = vsel %vm44, %v39, 0
      %v49 = vsel %vm44, %v40, 0
      %vm51 = vcmask 1043456
      %v52 = vsel %vm51, %v41, 0
      %v54 = vsel %vm51, %v43, 0
      %56 = vmatprep.subr.mxu0 %v54
      %57 = vmatpush1.msra.mxu0 %v52
      %58 = vmatprep.subr.mxu0 0.0
      %59 = vmatpush1.msra.mxu0 0.0
      %60 = vmatprep.subr.mxu0 0.0
      %61 = vmatpush1.msra.mxu0 0.0
      %62 = vmatprep.subr.mxu0 0.0
      %63 = vmatpush1.msra.mxu0 0.0
      %64 = vmatprep.subr.mxu0 0.0
      %65 = vmatpush1.msra.mxu0 0.0
      %66 = vmatprep.subr.mxu0 0.0
      %67 = vmatpush1.msra.mxu0 0.0
      %68 = vmatprep.subr.mxu0 0.0
      %69 = vmatpush1.msra.mxu0 0.0
      %70 = vmatprep.subr.mxu0 0.0
      %71 = vmatpush1.msra.mxu0 0.0
      %72 = vmatprep.subr.mxu0 0.0
      %73 = vmatpush1.msra.mxu0 0.0
      %74 = vmatprep.subr.mxu0 0.0
      %75 = vmatpush1.msra.mxu0 0.0
      %76 = vmatprep.subr.mxu0 0.0
      %77 = vmatpush1.msra.mxu0 0.0
      %78 = vmatprep.subr.mxu0 0.0
      %79 = vmatpush1.msra.mxu0 0.0
      %80 = vmatprep.subr.mxu0 0.0
      %81 = vmatpush1.msra.mxu0 0.0
      %82 = vmatprep.subr.mxu0 0.0
      %83 = vmatpush1.msra.mxu0 0.0
      %84 = vmatprep.subr.mxu0 0.0
      %85 = vmatpush1.msra.mxu0 0.0
      %86 = vmatprep.subr.mxu0 0.0
      %87 = vmatpush1.msra.mxu0 0.0
      %88 = vmatprep.subr.mxu0 0.0
      %89 = vmatpush1.msra.mxu0 0.0
      %90 = vmatprep.subr.mxu0 0.0
      %91 = vmatpush1.msra.mxu0 0.0
      %92 = vmatprep.subr.mxu0 0.0
      %93 = vmatpush1.msra.mxu0 0.0
      %94 = vmatprep.subr.mxu0 0.0
      %95 = vmatpush1.msra.mxu0 0.0
      %96 = vmatprep.subr.mxu0 0.0
      %97 = vmatpush1.msra.mxu0 0.0
      %98 = vmatprep.subr.mxu0 0.0
      %99 = vmatpush1.msra.mxu0 0.0
      %100 = vmatprep.subr.mxu0 0.0
      %101 = vmatpush1.msra.mxu0 0.0
      %102 = vmatprep.subr.mxu0 0.0
      %103 = vmatpush1.msra.mxu0 0.0
      %104 = vmatprep.subr.mxu0 0.0
      %105 = vmatpush1.msra.mxu0 0.0
      %106 = vmatprep.subr.mxu0 0.0
      %107 = vmatpush1.msra.mxu0 0.0
      %108 = vmatprep.subr.mxu0 0.0
      %109 = vmatpush1.msra.mxu0 0.0
      %110 = vmatprep.subr.mxu0 0.0
      %111 = vmatpush1.msra.mxu0 0.0
      %112 = vmatprep.subr.mxu0 0.0
      %113 = vmatpush1.msra.mxu0 0.0
      %114 = vmatprep.subr.mxu0 0.0
      %115 = vmatpush1.msra.mxu0 0.0
      %116 = vmatprep.subr.mxu0 0.0
      %117 = vmatpush1.msra.mxu0 0.0
      %118 = vmatprep.subr.mxu0 0.0
      %119 = vmatpush1.msra.mxu0 0.0
      %120 = vmatprep.mubr.f32.mxu0 0.0
      %121 = vmatmul.mubr.f32.gmra.mrb[0].mxu0 %v46
      %v122 = vpop.f32.mrb[0].mxu0
      %v123 = vadd.f32 0.0, %v122
      %v124 = vpop.f32.mrb[0].mxu0
      %v125 = vadd.f32 0.0, %v124
      %126 = vmatprep.mubr.f32.mxu0 0.0
      %127 = vmatmul.mubr.f32.gmra.mrb[0].mxu0 %v49
      %v128 = vpop.f32.mrb[0].mxu0
      %v129 = vadd.f32 0.0, %v128
      %v130 = vpop.f32.mrb[0].mxu0
      %v131 = vadd.f32 0.0, %v130
      %132 = vdwg.mxu0
      %v133 = vsub.f32 0.0, %v123
      %v134 = vsub.f32 0.0, %v125
      %v135 = vsub.f32 0.0, %v129
      %v136 = vsub.f32 0.0, %v131
      %137 = vst [vmem:[#allocation3] sm:$0xff] %v133
      %138 = vst [vmem:[#allocation3 + $0x8] sm:$0xff] %v134
      %139 = vst [vmem:[#allocation3 + $0x10] sm:$0xff] %v135
      %140 = vst [vmem:[#allocation3 + $0x18] sm:$0xff] %v136
    $region29: #{tpu_custom_call.1} parent=1 // pred_fallthru
      _
    %v141 = vld [vmem:[#allocation4] sm:$0xff]
    %v142 = vld [vmem:[#allocation4 + $0x8] sm:$0xff]
    %v143 = vld [vmem:[#allocation4 + $0x10] sm:$0xff]
    %v144 = vld [vmem:[#allocation4 + $0x18] sm:$0xff]
    %v145 = vld [vmem:[#allocation4 + $0x20] sm:$0xff]
    %v146 = vld [vmem:[#allocation4 + $0x28] sm:$0xff]
    %v147 = vld [vmem:[#allocation4 + $0x30] sm:$0xff]
    %v148 = vld [vmem:[#allocation4 + $0x38] sm:$0xff]
    %v149 = vand.u32 %v141, 15
    %v150 = vand.u32 %v142, 15
    %v151 = vand.u32 %v143, 15
    %v152 = vand.u32 %v144, 15
    %v153 = vand.u32 %v145, 15
    %v154 = vand.u32 %v146, 15
    %v155 = vand.u32 %v147, 15
    %v156 = vand.u32 %v148, 15
    %v157 = vcvt.s32.f32 %v149
    %v158 = vcvt.s32.f32 %v150
    %v159 = vcvt.s32.f32 %v151
    %v160 = vcvt.s32.f32 %v152
    %v161 = vcvt.s32.f32 %v153
    %v162 = vcvt.s32.f32 %v154
    %v163 = vcvt.s32.f32 %v155
    %v164 = vcvt.s32.f32 %v156
    %165 = vst [vmem:[#allocation2] sm:$0xff] %v157
    %166 = vst [vmem:[#allocation2 + $0x8] sm:$0xff] %v158
    %167 = vst [vmem:[#allocation2 + $0x10] sm:$0xff] %v159
    %168 = vst [vmem:[#allocation2 + $0x18] sm:$0xff] %v160
    %169 = vst [vmem:[#allocation2 + $0x20] sm:$0xff] %v161
    %170 = vst [vmem:[#allocation2 + $0x28] sm:$0xff] %v162
    %171 = vst [vmem:[#allocation2 + $0x30] sm:$0xff] %v163
    %172 = vst [vmem:[#allocation2 + $0x38] sm:$0xff] %v164
    %v173 = vshra.s32 %v141, 4
    %v174 = vshra.s32 %v142, 4
    %v175 = vshra.s32 %v143, 4
    %v176 = vshra.s32 %v144, 4
    %v177 = vshra.s32 %v145, 4
    %v178 = vshra.s32 %v146, 4
    %v179 = vshra.s32 %v147, 4
    %v180 = vshra.s32 %v148, 4
    %v181 = vand.u32 %v173, 15
    %v182 = vand.u32 %v174, 15
    %v183 = vand.u32 %v175, 15
    %v184 = vand.u32 %v176, 15
    %v185 = vand.u32 %v177, 15
    %v186 = vand.u32 %v178, 15
    %v187 = vand.u32 %v179, 15
    %v188 = vand.u32 %v180, 15
    %v189 = vcvt.s32.f32 %v181
    %v190 = vcvt.s32.f32 %v182
    %v191 = vcvt.s32.f32 %v183
    %v192 = vcvt.s32.f32 %v184
    %v193 = vcvt.s32.f32 %v185
    %v194 = vcvt.s32.f32 %v186
    %v195 = vcvt.s32.f32 %v187
    %v196 = vcvt.s32.f32 %v188
    %197 = vst [vmem:[#allocation2 + $0x40] sm:$0xff] %v189
    %198 = vst [vmem:[#allocation2 + $0x48] sm:$0xff] %v190
    %199 = vst [vmem:[#allocation2 + $0x50] sm:$0xff] %v191
    %200 = vst [vmem:[#allocation2 + $0x58] sm:$0xff] %v192
    %201 = vst [vmem:[#allocation2 + $0x60] sm:$0xff] %v193
    %202 = vst [vmem:[#allocation2 + $0x68] sm:$0xff] %v194
    %203 = vst [vmem:[#allocation2 + $0x70] sm:$0xff] %v195
    %204 = vst [vmem:[#allocation2 + $0x78] sm:$0xff] %v196
    %v205 = vshra.s32 %v141, 8
    %v206 = vshra.s32 %v142, 8
    %v207 = vshra.s32 %v143, 8
    %v208 = vshra.s32 %v144, 8
    %v209 = vshra.s32 %v145, 8
    %v210 = vshra.s32 %v146, 8
    %v211 = vshra.s32 %v147, 8
    %v212 = vshra.s32 %v148, 8
    %v213 = vand.u32 %v205, 15
    %v214 = vand.u32 %v206, 15
    %v215 = vand.u32 %v207, 15
    %v216 = vand.u32 %v208, 15
    %v217 = vand.u32 %v209, 15
    %v218 = vand.u32 %v210, 15
    %v219 = vand.u32 %v211, 15
    %v220 = vand.u32 %v212, 15
    %v221 = vcvt.s32.f32 %v213
    %v222 = vcvt.s32.f32 %v214
    %v223 = vcvt.s32.f32 %v215
    %v224 = vcvt.s32.f32 %v216
    %v225 = vcvt.s32.f32 %v217
    %v226 = vcvt.s32.f32 %v218
    %v227 = vcvt.s32.f32 %v219
    %v228 = vcvt.s32.f32 %v220
    %229 = vst [vmem:[#allocation2 + $0x80] sm:$0xff] %v221
    %230 = vst [vmem:[#allocation2 + $0x88] sm:$0xff] %v222
    %231 = vst [vmem:[#allocation2 + $0x90] sm:$0xff] %v223
    %232 = vst [vmem:[#allocation2 + $0x98] sm:$0xff] %v224
    %233 = vst [vmem:[#allocation2 + $0xa0] sm:$0xff] %v225
    %234 = vst [vmem:[#allocation2 + $0xa8] sm:$0xff] %v226
    %235 = vst [vmem:[#allocation2 + $0xb0] sm:$0xff] %v227
    %236 = vst [vmem:[#allocation2 + $0xb8] sm:$0xff] %v228
    %v237 = vshra.s32 %v141, 12
    %v238 = vshra.s32 %v142, 12
    %v239 = vshra.s32 %v143, 12
    %v240 = vshra.s32 %v144, 12
    %v241 = vshra.s32 %v145, 12
    %v242 = vshra.s32 %v146, 12
    %v243 = vshra.s32 %v147, 12
    %v244 = vshra.s32 %v148, 12
    %v245 = vand.u32 %v237, 15
    %v246 = vand.u32 %v238, 15
    %v247 = vand.u32 %v239, 15
    %v248 = vand.u32 %v240, 15
    %v249 = vand.u32 %v241, 15
    %v250 = vand.u32 %v242, 15
    %v251 = vand.u32 %v243, 15
    %v252 = vand.u32 %v244, 15
    %v253 = vcvt.s32.f32 %v245
    %v254 = vcvt.s32.f32 %v246
    %v255 = vcvt.s32.f32 %v247
    %v256 = vcvt.s32.f32 %v248
    %v257 = vcvt.s32.f32 %v249
    %v258 = vcvt.s32.f32 %v250
    %v259 = vcvt.s32.f32 %v251
    %v260 = vcvt.s32.f32 %v252
    %261 = vst [vmem:[#allocation2 + $0xc0] sm:$0xff] %v253
    %262 = vst [vmem:[#allocation2 + $0xc8] sm:$0xff] %v254
    %263 = vst [vmem:[#allocation2 + $0xd0] sm:$0xff] %v255
    %264 = vst [vmem:[#allocation2 + $0xd8] sm:$0xff] %v256
    %265 = vst [vmem:[#allocation2 + $0xe0] sm:$0xff] %v257
    %266 = vst [vmem:[#allocation2 + $0xe8] sm:$0xff] %v258
    %267 = vst [vmem:[#allocation2 + $0xf0] sm:$0xff] %v259
    %268 = vst [vmem:[#allocation2 + $0xf8] sm:$0xff] %v260
    %v269 = vshra.s32 %v141, 16
    %v270 = vshra.s32 %v142, 16
    %v271 = vshra.s32 %v143, 16
    %v272 = vshra.s32 %v144, 16
    %v273 = vshra.s32 %v145, 16
    %v274 = vshra.s32 %v146, 16
    %v275 = vshra.s32 %v147, 16
    %v276 = vshra.s32 %v148, 16
    %v277 = vand.u32 %v269, 15
    %v278 = vand.u32 %v270, 15
    %v279 = vand.u32 %v271, 15
    %v280 = vand.u32 %v272, 15
    %v281 = vand.u32 %v273, 15
    %v282 = vand.u32 %v274, 15
    %v283 = vand.u32 %v275, 15
    %v284 = vand.u32 %v276, 15
    %v285 = vcvt.s32.f32 %v277
    %v286 = vcvt.s32.f32 %v278
    %v287 = vcvt.s32.f32 %v279
    %v288 = vcvt.s32.f32 %v280
    %v289 = vcvt.s32.f32 %v281
    %v290 = vcvt.s32.f32 %v282
    %v291 = vcvt.s32.f32 %v283
    %v292 = vcvt.s32.f32 %v284
    %293 = vst [vmem:[#allocation2 + $0x100] sm:$0xff] %v285
    %294 = vst [vmem:[#allocation2 + $0x108] sm:$0xff] %v286
    %295 = vst [vmem:[#allocation2 + $0x110] sm:$0xff] %v287
    %296 = vst [vmem:[#allocation2 + $0x118] sm:$0xff] %v288
    %297 = vst [vmem:[#allocation2 + $0x120] sm:$0xff] %v289
    %298 = vst [vmem:[#allocation2 + $0x128] sm:$0xff] %v290
    %299 = vst [vmem:[#allocation2 + $0x130] sm:$0xff] %v291
    %300 = vst [vmem:[#allocation2 + $0x138] sm:$0xff] %v292
    %v301 = vshra.s32 %v141, 20
    %v302 = vshra.s32 %v142, 20
    %v303 = vshra.s32 %v143, 20
    %v304 = vshra.s32 %v144, 20
    %v305 = vshra.s32 %v145, 20
    %v306 = vshra.s32 %v146, 20
    %v307 = vshra.s32 %v147, 20
    %v308 = vshra.s32 %v148, 20
    %v309 = vand.u32 %v301, 15
    %v310 = vand.u32 %v302, 15
    %v311 = vand.u32 %v303, 15
    %v312 = vand.u32 %v304, 15
    %v313 = vand.u32 %v305, 15
    %v314 = vand.u32 %v306, 15
    %v315 = vand.u32 %v307, 15
    %v316 = vand.u32 %v308, 15
    %v317 = vcvt.s32.f32 %v309
    %v318 = vcvt.s32.f32 %v310
    %v319 = vcvt.s32.f32 %v311
    %v320 = vcvt.s32.f32 %v312
    %v321 = vcvt.s32.f32 %v313
    %v322 = vcvt.s32.f32 %v314
    %v323 = vcvt.s32.f32 %v315
    %v324 = vcvt.s32.f32 %v316
    %325 = vst [vmem:[#allocation2 + $0x140] sm:$0xff] %v317
    %326 = vst [vmem:[#allocation2 + $0x148] sm:$0xff] %v318
    %327 = vst [vmem:[#allocation2 + $0x150] sm:$0xff] %v319
    %328 = vst [vmem:[#allocation2 + $0x158] sm:$0xff] %v320
    %329 = vst [vmem:[#allocation2 + $0x160] sm:$0xff] %v321
    %330 = vst [vmem:[#allocation2 + $0x168] sm:$0xff] %v322
    %331 = vst [vmem:[#allocation2 + $0x170] sm:$0xff] %v323
    %332 = vst [vmem:[#allocation2 + $0x178] sm:$0xff] %v324
    %v333 = vshra.s32 %v141, 24
    %v334 = vshra.s32 %v142, 24
    %v335 = vshra.s32 %v143, 24
    %v336 = vshra.s32 %v144, 24
    %v337 = vshra.s32 %v145, 24
    %v338 = vshra.s32 %v146, 24
    %v339 = vshra.s32 %v147, 24
    %v340 = vshra.s32 %v148, 24
    %v341 = vand.u32 %v333, 15
    %v342 = vand.u32 %v334, 15
    %v343 = vand.u32 %v335, 15
    %v344 = vand.u32 %v336, 15
    %v345 = vand.u32 %v337, 15
    %v346 = vand.u32 %v338, 15
    %v347 = vand.u32 %v339, 15
    %v348 = vand.u32 %v340, 15
    %v349 = vcvt.s32.f32 %v341
    %v350 = vcvt.s32.f32 %v342
    %v351 = vcvt.s32.f32 %v343
    %v352 = vcvt.s32.f32 %v344
    %v353 = vcvt.s32.f32 %v345
    %v354 = vcvt.s32.f32 %v346
    %v355 = vcvt.s32.f32 %v347
    %v356 = vcvt.s32.f32 %v348
    %357 = vst [vmem:[#allocation2 + $0x180] sm:$0xff] %v349
    %358 = vst [vmem:[#allocation2 + $0x188] sm:$0xff] %v350
    %359 = vst [vmem:[#allocation2 + $0x190] sm:$0xff] %v351
    %360 = vst [vmem:[#allocation2 + $0x198] sm:$0xff] %v352
    %361 = vst [vmem:[#allocation2 + $0x1a0] sm:$0xff] %v353
    %362 = vst [vmem:[#allocation2 + $0x1a8] sm:$0xff] %v354
    %363 = vst [vmem:[#allocation2 + $0x1b0] sm:$0xff] %v355
    %364 = vst [vmem:[#allocation2 + $0x1b8] sm:$0xff] %v356
    %v365 = vshra.s32 %v141, 28
    %v366 = vshra.s32 %v142, 28
    %v367 = vshra.s32 %v143, 28
    %v368 = vshra.s32 %v144, 28
    %v369 = vshra.s32 %v145, 28
    %v370 = vshra.s32 %v146, 28
    %v371 = vshra.s32 %v147, 28
    %v372 = vshra.s32 %v148, 28
    %v373 = vand.u32 %v365, 15
    %v374 = vand.u32 %v366, 15
    %v375 = vand.u32 %v367, 15
    %v376 = vand.u32 %v368, 15
    %v377 = vand.u32 %v369, 15
    %v378 = vand.u32 %v370, 15
    %v379 = vand.u32 %v371, 15
    %v380 = vand.u32 %v372, 15
    %v381 = vcvt.s32.f32 %v373
    %v382 = vcvt.s32.f32 %v374
    %v383 = vcvt.s32.f32 %v375
    %v384 = vcvt.s32.f32 %v376
    %v385 = vcvt.s32.f32 %v377
    %v386 = vcvt.s32.f32 %v378
    %v387 = vcvt.s32.f32 %v379
    %v388 = vcvt.s32.f32 %v380
    %389 = vst [vmem:[#allocation2 + $0x1c0] sm:$0xff] %v381
    %390 = vst [vmem:[#allocation2 + $0x1c8] sm:$0xff] %v382
    %391 = vst [vmem:[#allocation2 + $0x1d0] sm:$0xff] %v383
    %392 = vst [vmem:[#allocation2 + $0x1d8] sm:$0xff] %v384
    %393 = vst [vmem:[#allocation2 + $0x1e0] sm:$0xff] %v385
    %394 = vst [vmem:[#allocation2 + $0x1e8] sm:$0xff] %v386
    %395 = vst [vmem:[#allocation2 + $0x1f0] sm:$0xff] %v387
    %396 = vst [vmem:[#allocation2 + $0x1f8] sm:$0xff] %v388
    %v397 = vld [vmem:[#allocation2] sm:$0xff]
    %v398 = vld [vmem:[#allocation2 + $0x8] sm:$0xff]
    %v399 = vld [vmem:[#allocation2 + $0x10] sm:$0xff]
    %v400 = vld [vmem:[#allocation2 + $0x18] sm:$0xff]
    %v401 = vld [vmem:[#allocation2 + $0x20] sm:$0xff]
    %v402 = vld [vmem:[#allocation2 + $0x28] sm:$0xff]
    %v403 = vld [vmem:[#allocation2 + $0x30] sm:$0xff]
    %v404 = vld [vmem:[#allocation2 + $0x38] sm:$0xff]
    %v405 = vld [vmem:[#allocation2 + $0x40] sm:$0xff]
    %v406 = vld [vmem:[#allocation2 + $0x48] sm:$0xff]
    %v407 = vld [vmem:[#allocation2 + $0x50] sm:$0xff]
    %v408 = vld [vmem:[#allocation2 + $0x58] sm:$0xff]
    %v409 = vld [vmem:[#allocation2 + $0x60] sm:$0xff]
    %v410 = vld [vmem:[#allocation2 + $0x68] sm:$0xff]
    %v411 = vld [vmem:[#allocation2 + $0x70] sm:$0xff]
    %v412 = vld [vmem:[#allocation2 + $0x78] sm:$0xff]
    %v413 = vld [vmem:[#allocation2 + $0x80] sm:$0xff]
    %v414 = vld [vmem:[#allocation2 + $0x88] sm:$0xff]
    %v415 = vld [vmem:[#allocation2 + $0x90] sm:$0xff]
    %v416 = vld [vmem:[#allocation2 + $0x98] sm:$0xff]
    %v417 = vld [vmem:[#allocation2 + $0xa0] sm:$0xff]
    %v418 = vld [vmem:[#allocation2 + $0xa8] sm:$0xff]
    %v419 = vld [vmem:[#allocation2 + $0xb0] sm:$0xff]
    %v420 = vld [vmem:[#allocation2 + $0xb8] sm:$0xff]
    %v421 = vld [vmem:[#allocation2 + $0xc0] sm:$0xff]
    %v422 = vld [vmem:[#allocation2 + $0xc8] sm:$0xff]
    %v423 = vld [vmem:[#allocation2 + $0xd0] sm:$0xff]
    %v424 = vld [vmem:[#allocation2 + $0xd8] sm:$0xff]
    %v425 = vld [vmem:[#allocation2 + $0xe0] sm:$0xff]
    %v426 = vld [vmem:[#allocation2 + $0xe8] sm:$0xff]
    %v427 = vld [vmem:[#allocation2 + $0xf0] sm:$0xff]
    %v428 = vld [vmem:[#allocation2 + $0xf8] sm:$0xff]
    %v429 = vld [vmem:[#allocation2 + $0x100] sm:$0xff]
    %v430 = vld [vmem:[#allocation2 + $0x108] sm:$0xff]
    %v431 = vld [vmem:[#allocation2 + $0x110] sm:$0xff]
    %v432 = vld [vmem:[#allocation2 + $0x118] sm:$0xff]
    %v433 = vld [vmem:[#allocation2 + $0x120] sm:$0xff]
    %v434 = vld [vmem:[#allocation2 + $0x128] sm:$0xff]
    %v435 = vld [vmem:[#allocation2 + $0x130] sm:$0xff]
    %v436 = vld [vmem:[#allocation2 + $0x138] sm:$0xff]
    %v437 = vld [vmem:[#allocation2 + $0x140] sm:$0xff]
    %v438 = vld [vmem:[#allocation2 + $0x148] sm:$0xff]
    %v439 = vld [vmem:[#allocation2 + $0x150] sm:$0xff]
    %v440 = vld [vmem:[#allocation2 + $0x158] sm:$0xff]
    %v441 = vld [vmem:[#allocation2 + $0x160] sm:$0xff]
    %v442 = vld [vmem:[#allocation2 + $0x168] sm:$0xff]
    %v443 = vld [vmem:[#allocation2 + $0x170] sm:$0xff]
    %v444 = vld [vmem:[#allocation2 + $0x178] sm:$0xff]
    %v445 = vld [vmem:[#allocation2 + $0x180] sm:$0xff]
    %v446 = vld [vmem:[#allocation2 + $0x188] sm:$0xff]
    %v447 = vld [vmem:[#allocation2 + $0x190] sm:$0xff]
    %v448 = vld [vmem:[#allocation2 + $0x198] sm:$0xff]
    %v449 = vld [vmem:[#allocation2 + $0x1a0] sm:$0xff]
    %v450 = vld [vmem:[#allocation2 + $0x1a8] sm:$0xff]
    %v451 = vld [vmem:[#allocation2 + $0x1b0] sm:$0xff]
    %v452 = vld [vmem:[#allocation2 + $0x1b8] sm:$0xff]
    %v453 = vld [vmem:[#allocation2 + $0x1c0] sm:$0xff]
    %v454 = vld [vmem:[#allocation2 + $0x1c8] sm:$0xff]
    %v455 = vld [vmem:[#allocation2 + $0x1d0] sm:$0xff]
    %v456 = vld [vmem:[#allocation2 + $0x1d8] sm:$0xff]
    %v457 = vld [vmem:[#allocation2 + $0x1e0] sm:$0xff]
    %v458 = vld [vmem:[#allocation2 + $0x1e8] sm:$0xff]
    %v459 = vld [vmem:[#allocation2 + $0x1f0] sm:$0xff]
    %v460 = vld [vmem:[#allocation2 + $0x1f8] sm:$0xff]
    %v461 = vld [vmem:[%s3] sm:$0xff]
    %v464 = vunpack.c.l.s4 1966171168
    %v465 = vunpack.c.0.s8 %v464
    %v466 = vlaneseq
    %v467 = vshrl.u32 %v466, 7
    %v468 = vsub.s32 %v465, %v467
    %v469 = vrot.slane %v461, %v468
    %v470 = vcombine.high %v469, %v469
    %v472 = vunpack.c.l.s4 1966171168
    %v473 = vunpack.c.0.s8 %v472
    %v474 = vlaneseq
    %v475 = vshrl.u32 %v474, 7
    %v476 = vsub.s32 %v473, %v475
    %v477 = vrot.slane %v469, %v476
    %v479 = vunpack.c.l.s4 1966171168
    %v480 = vunpack.c.0.s8 %v479
    %v481 = vlaneseq
    %v482 = vshrl.u32 %v481, 7
    %v483 = vsub.s32 %v480, %v482
    %v484 = vrot.slane %v470, %v483
    %v485 = vcombine.high %v477, %v477
    %v486 = vcombine.high %v484, %v484
    %v487 = vlaneseq
    %v488 = vshrl.u32 %v487, 7
    %v489 = vsub.s32 0, %v488
    %v490 = vrot.slane %v477, %v489
    %v491 = vlaneseq
    %v492 = vshrl.u32 %v491, 7
    %v493 = vsub.s32 1, %v492
    %v494 = vrot.slane %v477, %v493
    %v495 = vlaneseq
    %v496 = vshrl.u32 %v495, 7
    %v497 = vsub.s32 0, %v496
    %v498 = vrot.slane %v484, %v497
    %v499 = vlaneseq
    %v500 = vshrl.u32 %v499, 7
    %v501 = vsub.s32 1, %v500
    %v502 = vrot.slane %v484, %v501
    %v503 = vlaneseq
    %v504 = vshrl.u32 %v503, 7
    %v505 = vsub.s32 0, %v504
    %v506 = vrot.slane %v485, %v505
    %v507 = vlaneseq
    %v508 = vshrl.u32 %v507, 7
    %v509 = vsub.s32 1, %v508
    %v510 = vrot.slane %v485, %v509
    %v511 = vlaneseq
    %v512 = vshrl.u32 %v511, 7
    %v513 = vsub.s32 0, %v512
    %v514 = vrot.slane %v486, %v513
    %v515 = vlaneseq
    %v516 = vshrl.u32 %v515, 7
    %v517 = vsub.s32 1, %v516
    %v518 = vrot.slane %v486, %v517
    %v527 = vmul.f32 %v397, %v490
    %v528 = vmul.f32 %v398, %v494
    %v529 = vmul.f32 %v399, %v490
    %v530 = vmul.f32 %v400, %v494
    %v531 = vmul.f32 %v401, %v490
    %v532 = vmul.f32 %v402, %v494
    %v533 = vmul.f32 %v403, %v490
    %v534 = vmul.f32 %v404, %v494
    %v535 = vmul.f32 %v405, %v490
    %v536 = vmul.f32 %v406, %v494
    %v537 = vmul.f32 %v407, %v490
    %v538 = vmul.f32 %v408, %v494
    %v539 = vmul.f32 %v409, %v490
    %v540 = vmul.f32 %v410, %v494
    %v541 = vmul.f32 %v411, %v490
    %v542 = vmul.f32 %v412, %v494
    %v543 = vmul.f32 %v413, %v498
    %v544 = vmul.f32 %v414, %v502
    %v545 = vmul.f32 %v415, %v498
    %v546 = vmul.f32 %v416, %v502
    %v547 = vmul.f32 %v417, %v498
    %v548 = vmul.f32 %v418, %v502
    %v549 = vmul.f32 %v419, %v498
    %v550 = vmul.f32 %v420, %v502
    %v551 = vmul.f32 %v421, %v498
    %v552 = vmul.f32 %v422, %v502
    %v553 = vmul.f32 %v423, %v498
    %v554 = vmul.f32 %v424, %v502
    %v555 = vmul.f32 %v425, %v498
    %v556 = vmul.f32 %v426, %v502
    %v557 = vmul.f32 %v427, %v498
    %v558 = vmul.f32 %v428, %v502
    %v559 = vmul.f32 %v429, %v506
    %v560 = vmul.f32 %v430, %v510
    %v561 = vmul.f32 %v431, %v506
    %v562 = vmul.f32 %v432, %v510
    %v563 = vmul.f32 %v433, %v506
    %v564 = vmul.f32 %v434, %v510
    %v565 = vmul.f32 %v435, %v506
    %v566 = vmul.f32 %v436, %v510
    %v567 = vmul.f32 %v437, %v506
    %v568 = vmul.f32 %v438, %v510
    %v569 = vmul.f32 %v439, %v506
    %v570 = vmul.f32 %v440, %v510
    %v571 = vmul.f32 %v441, %v506
    %v572 = vmul.f32 %v442, %v510
    %v573 = vmul.f32 %v443, %v506
    %v574 = vmul.f32 %v444, %v510
    %v575 = vmul.f32 %v445, %v514
    %v576 = vmul.f32 %v446, %v518
    %v577 = vmul.f32 %v447, %v514
    %v578 = vmul.f32 %v448, %v518
    %v579 = vmul.f32 %v449, %v514
    %v580 = vmul.f32 %v450, %v518
    %v581 = vmul.f32 %v451, %v514
    %v582 = vmul.f32 %v452, %v518
    %v583 = vmul.f32 %v453, %v514
    %v584 = vmul.f32 %v454, %v518
    %v585 = vmul.f32 %v455, %v514
    %v586 = vmul.f32 %v456, %v518
    %v587 = vmul.f32 %v457, %v514
    %v588 = vmul.f32 %v458, %v518
    %v589 = vmul.f32 %v459, %v514
    %v590 = vmul.f32 %v460, %v518
    %v591 = vpack.c.bf16 %v529, %v527
    %v592 = vpack.c.bf16 %v530, %v528
    %v593 = vpack.c.bf16 %v533, %v531
    %v594 = vpack.c.bf16 %v534, %v532
    %v595 = vpack.c.bf16 %v537, %v535
    %v596 = vpack.c.bf16 %v538, %v536
    %v597 = vpack.c.bf16 %v541, %v539
    %v598 = vpack.c.bf16 %v542, %v540
    %v599 = vpack.c.bf16 %v545, %v543
    %v600 = vpack.c.bf16 %v546, %v544
    %v601 = vpack.c.bf16 %v549, %v547
    %v602 = vpack.c.bf16 %v550, %v548
    %v603 = vpack.c.bf16 %v553, %v551
    %v604 = vpack.c.bf16 %v554, %v552
    %v605 = vpack.c.bf16 %v557, %v555
    %v606 = vpack.c.bf16 %v558, %v556
    %v607 = vpack.c.bf16 %v561, %v559
    %v608 = vpack.c.bf16 %v562, %v560
    %v609 = vpack.c.bf16 %v565, %v563
    %v610 = vpack.c.bf16 %v566, %v564
    %v611 = vpack.c.bf16 %v569, %v567
    %v612 = vpack.c.bf16 %v570, %v568
    %v613 = vpack.c.bf16 %v573, %v571
    %v614 = vpack.c.bf16 %v574, %v572
    %v615 = vpack.c.bf16 %v577, %v575
    %v616 = vpack.c.bf16 %v578, %v576
    %v617 = vpack.c.bf16 %v581, %v579
    %v618 = vpack.c.bf16 %v582, %v580
    %v619 = vpack.c.bf16 %v585, %v583
    %v620 = vpack.c.bf16 %v586, %v584
    %v621 = vpack.c.bf16 %v589, %v587
    %v622 = vpack.c.bf16 %v590, %v588
    %v623 = vld [vmem:[#allocation3] sm:$0xff]
    %v624 = vld [vmem:[#allocation3 + $0x8] sm:$0xff]
    %v625 = vld [vmem:[#allocation3 + $0x10] sm:$0xff]
    %v626 = vld [vmem:[#allocation3 + $0x18] sm:$0xff]
    %v627 = vld [vmem:[%s0] sm:$0xff]
    %v628 = vld [vmem:[%s0 + $0x8] sm:$0xff]
    %v631 = vunpack.c.l.b16 %v627
    %v632 = vunpack.c.h.b16 %v627
    %v633 = vunpack.c.l.b16 %v628
    %v634 = vunpack.c.h.b16 %v628
    %v635 = vpack.c.b16 %v633, %v631
    %v636 = vpack.c.b16 %v634, %v632
    %639 = vmatprep.subr.bf16.mxu0 %v592
    %640 = vmatpush1.bf16.msra.mxu0 %v591
    %641 = vmatprep.subr.bf16.mxu0 %v594
    %642 = vmatpush1.bf16.msra.mxu0 %v593
    %643 = vmatprep.subr.bf16.mxu0 %v596
    %644 = vmatpush1.bf16.msra.mxu0 %v595
    %645 = vmatprep.subr.bf16.mxu0 %v598
    %646 = vmatpush1.bf16.msra.mxu0 %v597
    %647 = vmatprep.subr.bf16.mxu0 %v600
    %648 = vmatpush1.bf16.msra.mxu0 %v599
    %649 = vmatprep.subr.bf16.mxu0 %v602
    %650 = vmatpush1.bf16.msra.mxu0 %v601
    %651 = vmatprep.subr.bf16.mxu0 %v604
    %652 = vmatpush1.bf16.msra.mxu0 %v603
    %653 = vmatprep.subr.bf16.mxu0 %v606
    %654 = vmatpush1.bf16.msra.mxu0 %v605
    %655 = vmatprep.subr.bf16.mxu0 %v608
    %656 = vmatpush1.bf16.msra.mxu0 %v607
    %657 = vmatprep.subr.bf16.mxu0 %v610
    %658 = vmatpush1.bf16.msra.mxu0 %v609
    %659 = vmatprep.subr.bf16.mxu0 %v612
    %660 = vmatpush1.bf16.msra.mxu0 %v611
    %661 = vmatprep.subr.bf16.mxu0 %v614
    %662 = vmatpush1.bf16.msra.mxu0 %v613
    %663 = vmatprep.subr.bf16.mxu0 %v616
    %664 = vmatpush1.bf16.msra.mxu0 %v615
    %665 = vmatprep.subr.bf16.mxu0 %v618
    %666 = vmatpush1.bf16.msra.mxu0 %v617
    %667 = vmatprep.subr.bf16.mxu0 %v620
    %668 = vmatpush1.bf16.msra.mxu0 %v619
    %669 = vmatprep.subr.bf16.mxu0 %v622
    %670 = vmatpush1.bf16.msra.mxu0 %v621
    %671 = vmatprep.mubr.bf16.mxu0 %v636
    %672 = vmatmul.mubr.bf16.gmra.mrb[0].mxu0 %v635
    %v673 = vpop.f32.mrb[0].mxu0
    %v674 = vadd.f32 0.0, %v673
    %v675 = vpop.f32.mrb[0].mxu0
    %v676 = vadd.f32 0.0, %v675
    %v677 = vpop.f32.mrb[0].mxu0
    %v678 = vadd.f32 0.0, %v677
    %v679 = vpop.f32.mrb[0].mxu0
    %v680 = vadd.f32 0.0, %v679
    %681 = vdwg.mxu0
    %v682 = vadd.f32 %v623, %v674
    %v683 = vadd.f32 %v624, %v676
    %v684 = vadd.f32 %v625, %v678
    %v685 = vadd.f32 %v626, %v680
    %686 = vst [vmem:[#allocation3] sm:$0xff] %v682
    %687 = vst [vmem:[#allocation3 + $0x8] sm:$0xff] %v683
    %688 = vst [vmem:[#allocation3 + $0x10] sm:$0xff] %v684
    %689 = vst [vmem:[#allocation3 + $0x18] sm:$0xff] %v685
    // Predicated region
    $region30: #{tpu_custom_call.1} parent=1 // pred_check
      %p690 = pneg %p35
    $region31: #{tpu_custom_call.1} parent=1 // pred_check_branch
      %692 = sbr.rel (%p690) target = $region33
    $region32: #{tpu_custom_call.1} parent=1 // pred_region
      %v693 = vld [vmem:[#allocation3] sm:$0xff]
      %v694 = vld [vmem:[#allocation3 + $0x8] sm:$0xff]
      %v695 = vld [vmem:[#allocation3 + $0x10] sm:$0xff]
      %v696 = vld [vmem:[#allocation3 + $0x18] sm:$0xff]
      %697 = vst [vmem:[#allocation7] sm:$0xff] %v693
      %698 = vst [vmem:[#allocation7 + $0x8] sm:$0xff] %v694
      %699 = vst [vmem:[#allocation7 + $0x10] sm:$0xff] %v695
      %700 = vst [vmem:[#allocation7 + $0x18] sm:$0xff] %v696
    $region33: #{tpu_custom_call.1} parent=1 // pred_fallthru
      _
    // Predicated region
    $region34: #{tpu_custom_call.1} parent=1 // pred_check
      _
    $region35: #{tpu_custom_call.1} parent=1 // pred_check_branch
      %702 = sbr.rel (0) target = $region37
    $region36: #{tpu_custom_call.1} parent=1 // pred_region
      %s704 = ssub.s32 512, 512
      %705 = vsyncadd [#allocation6], %s704
      %s706 = sshll.u32 [#allocation7], 4
      %s707 = int_to_ptr.vmem [resolvable:$true] %s706
      %712 = dma.vmem_to_hbm [thread:$0]  %s707, 512, %s5, [#allocation6], 256, 256, 16
    $region37: #{tpu_custom_call.1} parent=1 // pred_fallthru
      _
    // Predicated region
    $region38: #{tpu_custom_call.1} parent=1 // pred_check
      _
    $region39: #{tpu_custom_call.1} parent=1 // pred_check_branch
      %714 = sbr.rel (0) target = $region41
    $region40: #{tpu_custom_call.1} parent=1 // pred_region
      %715 = dma.done [#allocation6], 512
    $region41: #{tpu_custom_call.1} parent=1 // pred_fallthru
      _
    %716 = vsyncpa [#allocation5], 1
    %717 = vsyncpa [#allocation6], 1

</llo_original>
